<compile_context>
chip_gen: v7x
topology: tpu7x:2x2x1
jax: 0.10.0
libtpu: 0.0.40
codegen_flags: <defaults>
</compile_context>

<pallas_src>
import functools
import math

import jax
import jax.numpy as jnp
from jax.experimental import pallas as pl
from jax.experimental.pallas import tpu as pltpu

_BN_EPS = 1e-5
_DOWN_TM = 512   # target output-pixel rows per down-matmul grid step


# -----------------------------------------------------------------------------
# Chip / feature probes (cached; run once, outside any jit trace)
# -----------------------------------------------------------------------------
@functools.lru_cache(maxsize=None)
def _vmem_limit_bytes():
    """~48 MiB on v7x (64 MiB physical VMEM), ~96 MiB on v5e/v6e (128 MiB)."""
    try:
        cap = int(pltpu.get_tpu_info().vmem_capacity_bytes)
    except Exception:
        cap = 64 * 1024 * 1024
    return min(cap * 3 // 4, 100 * 1024 * 1024)


@functools.lru_cache(maxsize=None)
def _single_buffer_mode():
    """pl.Buffered(1) for constant-index operands (weights / scale / shift),
    if the installed JAX supports pipeline_mode on pallas_call BlockSpecs."""
    try:
        mode = pl.Buffered(1)

        def _probe(x_ref, w_ref, o_ref):
            o_ref[...] = x_ref[...] + w_ref[...]

        fn = pl.pallas_call(
            _probe,
            out_shape=jax.ShapeDtypeStruct((16, 128), jnp.float32),
            grid=(2,),
            in_specs=[pl.BlockSpec((8, 128), lambda i: (i, 0)),
                      pl.BlockSpec((8, 128), lambda i: (0, 0),
                                   pipeline_mode=mode)],
            out_specs=pl.BlockSpec((8, 128), lambda i: (i, 0)),
        )
        jax.jit(fn).lower(jnp.zeros((16, 128), jnp.float32),
                          jnp.zeros((8, 128), jnp.float32)).compile()
        return mode
    except Exception:
        return None


def _const_spec(shape):
    """BlockSpec for an operand that is identical for every grid step."""
    idx = lambda *_args: (0,) * len(shape)
    mode = _single_buffer_mode()
    if mode is None:
        return pl.BlockSpec(shape, idx)
    return pl.BlockSpec(shape, idx, pipeline_mode=mode)


def _pick_tile(m, target):
    """Largest divisor of m that is <= target and a multiple of 8 (else m)."""
    t = math.gcd(m, target)
    return t if t % 8 == 0 else m


# -----------------------------------------------------------------------------
# Kernels
# -----------------------------------------------------------------------------
def _down_kernel(x_ref, w_ref, sc_ref, sh_ref, o_ref, *, pre):
    """Fused [LeakyReLU(0.2)] -> Conv2d(k4,s2,p1,bias=False) -> per-ch affine.

    x_ref : (TM, 16*Cin) bf16  - im2col rows (one row per output pixel)
    w_ref : (16*Cin, Cout) bf16
    sc/sh : (1, Cout) f32      - folded BatchNorm scale / shift
    o_ref : (TM, Cout)
    """
    x = x_ref[...]
    if pre == "leaky":
        # bf16 VALU; LeakyReLU(0) == 0 so the conv zero-padding stays valid.
        x = jnp.where(x > 0, x, 0.2 * x)
    acc = jnp.dot(x, w_ref[...], preferred_element_type=jnp.float32)
    o_ref[...] = (acc * sc_ref[...] + sh_ref[...]).astype(o_ref.dtype)


def _up_kernel(*refs, Hi, Wi, Cout, n_src, act):
    """Fused ReLU -> ConvTranspose2d(k4,s2,p1) -> per-ch affine [-> Tanh].

    refs = (p_0..p_{n-1}, w_0..w_{n-1}, scale, shift, out)
    p_i  : ((Hi+1)*(Wi+1), 4*C_i) bf16 - stride-1 2x2 windows of the 1-padded
           source i, spatially flattened (one row per window position)
    w_i  : (2, 2, 4*C_i, Cout) bf16    - per sub-pixel (a,b) weights
    out  : (2, 2, Hi, Wi*Cout)         - out[a,b,p,q*Cout+c] = y[2p+a, 2q+b, c]
    """
    ps = refs[:n_src]
    ws = refs[n_src:2 * n_src]
    sc_ref, sh_ref, o_ref = refs[2 * n_src:]

    # uprelu in bf16 (exact); ReLU(0)=0 keeps the zero padding valid.
    xs = [jnp.maximum(p[...], 0) for p in ps]
    sc = sc_ref[...].reshape(1, 1, Cout)
    sh = sh_ref[...].reshape(1, 1, Cout)

    for a in range(2):
        for b in range(2):
            acc = None
            for x, w in zip(xs, ws):        # skip-concat as accumulated matmuls
                part = jnp.dot(x, w[a, b], preferred_element_type=jnp.float32)
                acc = part if acc is None else acc + part
            # Shift/slice the (small, f32) result instead of the bf16 LHS.
            z = acc.reshape(Hi + 1, Wi + 1, Cout)[a:a + Hi, b:b + Wi, :]
            y = z * sc + sh
            if act == "tanh":
                y = jnp.tanh(y)
            o_ref[a, b] = y.reshape(Hi, Wi * Cout).astype(o_ref.dtype)


# -----------------------------------------------------------------------------
# Input packing (plain XLA, once per layer) and weight regrouping (at init)
# -----------------------------------------------------------------------------
def _im2col_k4s2p1(x):
    """(B,H,W,C) -> (B*Ho*Wo, 16*C): im2col rows of the 1-padded input,
    column order (dy, dx, ci) matching _prep_down_weight."""
    B, H, W, C = x.shape
    Ho, Wo = H // 2, W // 2
    xp = jnp.pad(x, ((0, 0), (1, 1), (1, 1), (0, 0)))
    cols = [xp[:, dy:dy + 2 * Ho:2, dx:dx + 2 * Wo:2, :]
            for dy in range(4) for dx in range(4)]
    return jnp.concatenate(cols, axis=-1).reshape(B * Ho * Wo, 16 * C)


def _overlap_patches_flat(x):
    """(B,H,W,C) -> (B,(H+1)*(W+1),4C): stride-1 2x2 windows of the 1-padded
    input, spatially flattened, channel order (u, v, ci)."""
    B, H, W, C = x.shape
    xp = jnp.pad(x, ((0, 0), (1, 1), (1, 1), (0, 0)))
    pieces = [xp[:, u:u + H + 1, v:v + W + 1, :]
              for u in range(2) for v in range(2)]
    return jnp.concatenate(pieces, axis=-1).reshape(B, (H + 1) * (W + 1), 4 * C)


def _prep_down_weight(w):
    """torch Conv2d weight (Cout, Cin, 4, 4) -> (16*Cin, Cout) bf16 matrix
    whose row order (dy, dx, ci) matches _im2col_k4s2p1."""
    co, ci = w.shape[0], w.shape[1]
    return jnp.transpose(w, (2, 3, 1, 0)).reshape(16 * ci, co).astype(jnp.bfloat16)


def _prep_up_weight(w):
    """torch ConvTranspose2d weight slice (Cin_i, Cout, 4, 4) -> (2,2,4*Cin_i,Cout) bf16.

    W[a, b, (u*2+v)*Cin + ci, co] = w[ci, co, 3-2u-a, 3-2v-b]
    (sub-pixel decomposition of the k=4, s=2, p=1 transposed conv).
    """
    ci, co = w.shape[0], w.shape[1]
    w = w[:, :, ::-1, ::-1]                     # (ci, co, m, n), m = 2u+a
    w = jnp.transpose(w, (2, 3, 0, 1))          # (m, n, ci, co)
    w = w.reshape(2, 2, 2, 2, ci, co)           # (u, a, v, b, ci, co)
    w = jnp.transpose(w, (1, 3, 0, 2, 4, 5))    # (a, b, u, v, ci, co)
    return w.reshape(2, 2, 4 * ci, co).astype(jnp.bfloat16)


# -----------------------------------------------------------------------------
# Layer wrappers
# -----------------------------------------------------------------------------
def conv_down(x, w_mat, scale, shift, *, pre, out_dtype=jnp.bfloat16):
    """[pre-activation] + Conv2d(k4,s2,p1,bias=False) + per-channel scale/shift."""
    x = x.astype(jnp.bfloat16)
    B, H, W, Cin = x.shape
    Ho, Wo = H // 2, W // 2
    K, Cout = w_mat.shape
    lhs = _im2col_k4s2p1(x)                       # (B*Ho*Wo, 16*Cin)
    M = B * Ho * Wo                               # batch folded into matmul M
    tm = _pick_tile(M, _DOWN_TM)

    kernel = functools.partial(_down_kernel, pre=pre)
    cost = pl.CostEstimate(
        flops=int(2 * M * K * Cout),
        transcendentals=0,
        bytes_accessed=int(2 * (M * K + K * Cout)
                           + M * Cout * jnp.dtype(out_dtype).itemsize))
    out = pl.pallas_call(
        kernel,
        out_shape=jax.ShapeDtypeStruct((M, Cout), out_dtype),
        grid=(M // tm,),
        in_specs=[pl.BlockSpec((tm, K), lambda i: (i, 0)),
                  _const_spec((K, Cout)),
                  _const_spec((1, Cout)),
                  _const_spec((1, Cout))],
        out_specs=pl.BlockSpec((tm, Cout), lambda i: (i, 0)),
        compiler_params=pltpu.CompilerParams(
            dimension_semantics=("parallel",),
            vmem_limit_bytes=_vmem_limit_bytes()),
        cost_estimate=cost,
    )(lhs, w_mat, scale, shift)
    return out.reshape(B, Ho, Wo, Cout)


def conv_up(srcs, w2s, scale, shift, *, act, out_dtype=jnp.bfloat16):
    """ReLU + ConvTranspose2d(k4,s2,p1) + per-channel scale/shift [+ Tanh].

    `srcs` is the list of tensors whose channel concatenation would be the
    upconv input (the U-Net `torch.cat` skip); the concat is never built --
    the kernel accumulates one matmul per source.
    """
    srcs = [s.astype(jnp.bfloat16) for s in srcs]
    B, Hi, Wi, _ = srcs[0].shape
    Cout = w2s[0].shape[-1]
    Mp = (Hi + 1) * (Wi + 1)
    patches = [_overlap_patches_flat(s) for s in srcs]   # (B, Mp, 4*C_i)

    kernel = functools.partial(_up_kernel, Hi=Hi, Wi=Wi, Cout=Cout,
                               n_src=len(srcs), act=act)
    in_specs = []
    for p in patches:
        c4 = p.shape[-1]
        in_specs.append(pl.BlockSpec((None, Mp, c4), lambda b: (b, 0, 0)))
    for w in w2s:
        in_specs.append(_const_spec(tuple(w.shape)))
    in_specs += [_const_spec((1, Cout)), _const_spec((1, Cout))]

    k_sum = sum(p.shape[-1] for p in patches)
    cost = pl.CostEstimate(
        flops=int(2 * B * 4 * Mp * k_sum * Cout),
        transcendentals=int(B * 4 * Hi * Wi * Cout) if act == "tanh" else 0,
        bytes_accessed=int(2 * sum(p.size for p in patches)
                           + 2 * sum(w.size for w in w2s)
                           + B * 4 * Hi * Wi * Cout
                           * jnp.dtype(out_dtype).itemsize))

    # TODO(synk): row-tile Hi (1 patch-row halo) + fold B into M for the deep
    #             blocks; grid=(B,) with whole-image blocks is fine at demo sizes.
    out = pl.pallas_call(
        kernel,
        out_shape=jax.ShapeDtypeStruct((B, 2, 2, Hi, Wi * Cout), out_dtype),
        grid=(B,),
        in_specs=in_specs,
        out_specs=pl.BlockSpec((None, 2, 2, Hi, Wi * Cout),
                               lambda b: (b, 0, 0, 0, 0)),
        compiler_params=pltpu.CompilerParams(
            dimension_semantics=("parallel",),
            vmem_limit_bytes=_vmem_limit_bytes()),
        cost_estimate=cost,
    )(*patches, *w2s, scale, shift)

    out = out.reshape(B, 2, 2, Hi, Wi, Cout)
    out = jnp.transpose(out, (0, 3, 1, 4, 2, 5)).reshape(B, 2 * Hi, 2 * Wi, Cout)
    return out


# -----------------------------------------------------------------------------
# UnetGenerator (recursive UnetSkipConnectionBlock structure)
# -----------------------------------------------------------------------------
def _fold_bn(gamma, beta, mean, var, eps=_BN_EPS):
    scale = gamma / jnp.sqrt(var + eps)
    shift = beta - mean * scale
    return (scale.reshape(1, -1).astype(jnp.float32),
            shift.reshape(1, -1).astype(jnp.float32))


def _make_block(key, outer_nc, inner_nc, input_nc=None, submodule=None,
                outermost=False, innermost=False):
    if input_nc is None:
        input_nc = outer_nc
    ks = jax.random.split(key, 12)
    blk = {"outermost": outermost, "innermost": innermost, "sub": submodule}

    # downconv: Conv2d(input_nc, inner_nc, 4, 2, 1, bias=False)  (BatchNorm => no bias)
    w_down = 0.02 * jax.random.normal(ks[0], (inner_nc, input_nc, 4, 4), jnp.float32)
    blk["down_w"] = _prep_down_weight(w_down)
    if outermost or innermost:                     # no downnorm in these blocks
        blk["down_scale"] = jnp.ones((1, inner_nc), jnp.float32)
        blk["down_shift"] = jnp.zeros((1, inner_nc), jnp.float32)
    else:
        blk["down_scale"], blk["down_shift"] = _fold_bn(
            1.0 + 0.02 * jax.random.normal(ks[1], (inner_nc,), jnp.float32),
            0.02 * jax.random.normal(ks[2], (inner_nc,), jnp.float32),
            0.1 * jax.random.normal(ks[3], (inner_nc,), jnp.float32),
            jax.random.uniform(ks[4], (inner_nc,), jnp.float32, 0.5, 1.5))

    # upconv: ConvTranspose2d(inner_nc or 2*inner_nc, outer_nc, 4, 2, 1)
    src_ch = [inner_nc] if innermost else [inner_nc, inner_nc]
    w_up = 0.02 * jax.random.normal(ks[5], (sum(src_ch), outer_nc, 4, 4), jnp.float32)
    ws, off = [], 0
    for c in src_ch:                               # split weight per skip source
        ws.append(_prep_up_weight(w_up[off:off + c]))
        off += c
    blk["up_ws"] = ws
    if outermost:                                  # bias=True, Tanh, no norm
        bias = 0.02 * jax.random.normal(ks[6], (outer_nc,), jnp.float32)
        blk["up_scale"] = jnp.ones((1, outer_nc), jnp.float32)
        blk["up_shift"] = bias.reshape(1, -1)
    else:
        blk["up_scale"], blk["up_shift"] = _fold_bn(
            1.0 + 0.02 * jax.random.normal(ks[7], (outer_nc,), jnp.float32),
            0.02 * jax.random.normal(ks[8], (outer_nc,), jnp.float32),
            0.1 * jax.random.normal(ks[9], (outer_nc,), jnp.float32),
            jax.random.uniform(ks[10], (outer_nc,), jnp.float32, 0.5, 1.5))
    return blk


def make_unet_params(key, input_nc, output_nc, num_downs, ngf=64):
    ks = list(jax.random.split(key, num_downs + 1))
    blk = _make_block(ks.pop(), ngf * 8, ngf * 8, innermost=True)
    for _ in range(num_downs - 5):
        blk = _make_block(ks.pop(), ngf * 8, ngf * 8, submodule=blk)
    blk = _make_block(ks.pop(), ngf * 4, ngf * 8, submodule=blk)
    blk = _make_block(ks.pop(), ngf * 2, ngf * 4, submodule=blk)
    blk = _make_block(ks.pop(), ngf, ngf * 2, submodule=blk)
    blk = _make_block(ks.pop(), output_nc, ngf, input_nc=input_nc,
                      submodule=blk, outermost=True)
    return blk


def _run_block(x, blk):
    h = conv_down(x, blk["down_w"], blk["down_scale"], blk["down_shift"],
                  pre=("none" if blk["outermost"] else "leaky"))
    srcs = [h] if blk["innermost"] else _run_block(h, blk["sub"])
    out = conv_up(srcs, blk["up_ws"], blk["up_scale"], blk["up_shift"],
                  act=("tanh" if blk["outermost"] else "none"),
                  out_dtype=(jnp.float32 if blk["outermost"] else jnp.bfloat16))
    if blk["outermost"]:
        return out
    # UnetSkipConnectionBlock.forward: torch.cat([x, model(x)], 1) -- returned
    # as a source list so the parent's upconv accumulates per-source matmuls
    # instead of materialising the concat in HBM.
    return [x, out]


def unet_forward(params, x_nchw):
    x = jnp.transpose(x_nchw, (0, 2, 3, 1))        # NCHW -> NHWC (channels on lanes)
    out = _run_block(x.astype(jnp.bfloat16), params)
    return jnp.transpose(out, (0, 3, 1, 2)).astype(jnp.float32)


# -----------------------------------------------------------------------------
# Plain-JAX references (numerical spot-check of the fused kernels)
# -----------------------------------------------------------------------------
def _ref_down(x, w, scale, shift, pre):
    if pre == "leaky":
        x = jnp.where(x > 0, x, 0.2 * x)
    y = jax.lax.conv_general_dilated(
        x, jnp.transpose(w, (2, 3, 1, 0)), window_strides=(2, 2),
        padding=((1, 1), (1, 1)), dimension_numbers=("NHWC", "HWIO", "NHWC"))
    return y * scale.reshape(1, 1, 1, -1) + shift.reshape(1, 1, 1, -1)


def _ref_up(srcs, w, scale, shift, act):
    x = jnp.maximum(jnp.concatenate(srcs, axis=-1), 0.0)
    wc = jnp.transpose(w, (1, 0, 2, 3))[:, :, ::-1, ::-1]   # ConvT -> equivalent conv
    y = jax.lax.conv_general_dilated(
        x, jnp.transpose(wc, (2, 3, 1, 0)), window_strides=(1, 1),
        padding=((2, 2), (2, 2)), lhs_dilation=(2, 2),
        dimension_numbers=("NHWC", "HWIO", "NHWC"))
    y = y * scale.reshape(1, 1, 1, -1) + shift.reshape(1, 1, 1, -1)
    return jnp.tanh(y) if act == "tanh" else y


# -----------------------------------------------------------------------------
if __name__ == "__main__":
    # Warm the feature probes once, outside any jit trace.
    _single_buffer_mode()
    _vmem_limit_bytes()

    root = jax.random.PRNGKey(0)
    k_check, k_param, k_in = jax.random.split(root, 3)

    # ---- spot-check both fused kernels against lax references ----
    kc = jax.random.split(k_check, 8)
    B, H, W, Cin, Cout = 2, 8, 8, 16, 24
    x = jax.random.normal(kc[0], (B, H, W, Cin), jnp.float32).astype(jnp.bfloat16)
    wd = 0.05 * jax.random.normal(kc[1], (Cout, Cin, 4, 4), jnp.float32)
    sc = 1.0 + 0.1 * jax.random.normal(kc[2], (1, Cout), jnp.float32)
    sh = 0.1 * jax.random.normal(kc[3], (1, Cout), jnp.float32)
    got = conv_down(x, _prep_down_weight(wd), sc, sh, pre="leaky",
                    out_dtype=jnp.float32)
    want = _ref_down(x.astype(jnp.float32),
                     wd.astype(jnp.bfloat16).astype(jnp.float32), sc, sh, "leaky")
    assert jnp.allclose(got, want, atol=2e-2, rtol=2e-2), "downconv mismatch"

    C1, C2, Co, Hi, Wi = 16, 8, 12, 4, 4
    s1 = jax.random.normal(kc[4], (B, Hi, Wi, C1), jnp.float32).astype(jnp.bfloat16)
    s2 = jax.random.normal(kc[5], (B, Hi, Wi, C2), jnp.float32).astype(jnp.bfloat16)
    wu = 0.05 * jax.random.normal(kc[6], (C1 + C2, Co, 4, 4), jnp.float32)
    scu = 1.0 + 0.1 * jax.random.normal(kc[7], (1, Co), jnp.float32)
    shu = jnp.zeros((1, Co), jnp.float32)
    got = conv_up([s1, s2], [_prep_up_weight(wu[:C1]), _prep_up_weight(wu[C1:])],
                  scu, shu, act="tanh", out_dtype=jnp.float32)
    want = _ref_up([s1.astype(jnp.float32), s2.astype(jnp.float32)],
                   wu.astype(jnp.bfloat16).astype(jnp.float32), scu, shu, "tanh")
    assert jnp.allclose(got, want, atol=2e-2, rtol=2e-2), "upconvT mismatch"

    # ---- full UnetGenerator forward (small shapes) ----
    input_nc, output_nc, num_downs, ngf = 3, 3, 6, 8
    Bx, Hx = 2, 64                                 # 6 downsamplings: 64 -> 1x1 bottleneck
    params = make_unet_params(k_param, input_nc, output_nc, num_downs, ngf)
    x_in = jax.random.normal(k_in, (Bx, input_nc, Hx, Hx), jnp.float32)

    fwd = jax.jit(lambda inp: unet_forward(params, inp))
    out = jax.block_until_ready(fwd(x_in))
    assert out.shape == (Bx, output_nc, Hx, Hx), out.shape
    assert bool(jnp.all(jnp.isfinite(out)))
    print("KERNEL_OK")
</pallas_src>

<mosaic_0001>
module attributes {stable_mosaic.version = 11 : i64} {
  func.func @_down_kernel(%arg0: i32, %arg1: memref<32x256xbf16, #tpu.memory_space<vmem>>, %arg2: memref<256x24xbf16, #tpu.memory_space<vmem>>, %arg3: memref<1x24xf32, #tpu.memory_space<vmem>>, %arg4: memref<1x24xf32, #tpu.memory_space<vmem>>, %arg5: memref<32x24xf32, #tpu.memory_space<vmem>>) attributes {dimension_semantics = [#tpu.dimension_semantics<parallel>], iteration_bounds = array<i64: 1>, scalar_prefetch = 0 : i64, scratch_operands = 0 : i64, tpu.core_type = #tpu.core_type<tc>, window_params = [{transform_indices = @transform_0, window_bounds = array<i64: 32, 256>}, {pipeline_mode = #tpu.pipeline_mode<synchronous>, transform_indices = @transform_1, window_bounds = array<i64: 256, 24>}, {pipeline_mode = #tpu.pipeline_mode<synchronous>, transform_indices = @transform_2, window_bounds = array<i64: 1, 24>}, {pipeline_mode = #tpu.pipeline_mode<synchronous>, transform_indices = @transform_3, window_bounds = array<i64: 1, 24>}, {transform_indices = @transform_4, window_bounds = array<i64: 32, 24>}]} {
    %c0 = arith.constant 0 : index
    %c0_0 = arith.constant 0 : index
    %0 = vector.load %arg1[%c0, %c0_0] : memref<32x256xbf16, #tpu.memory_space<vmem>>, vector<32x256xbf16>
    %cst = arith.constant 0.000000e+00 : bf16
    %1 = vector.broadcast %cst : bf16 to vector<32x256xbf16>
    %2 = arith.cmpf ogt, %0, %1 : vector<32x256xbf16>
    %cst_1 = arith.constant 2.001950e-01 : bf16
    %3 = vector.broadcast %cst_1 : bf16 to vector<32x256xbf16>
    %4 = arith.mulf %3, %0 : vector<32x256xbf16>
    %5 = arith.select %2, %0, %4 : vector<32x256xi1>, vector<32x256xbf16>
    %c0_2 = arith.constant 0 : index
    %c0_3 = arith.constant 0 : index
    %6 = vector.load %arg2[%c0_2, %c0_3] : memref<256x24xbf16, #tpu.memory_space<vmem>>, vector<256x24xbf16>
    %cst_4 = arith.constant dense<0.000000e+00> : vector<32x24xf32>
    %7 = tpu.matmul %5, %6, %cst_4 {dimension_numbers = #tpu.dot_dimension_numbers<[1], [0], [0], [1], [0, 0, 1, 1], [], []>} : vector<32x256xbf16>, vector<256x24xbf16>, vector<32x24xf32> -> vector<32x24xf32>
    %c0_5 = arith.constant 0 : index
    %c0_6 = arith.constant 0 : index
    %8 = vector.load %arg3[%c0_5, %c0_6] : memref<1x24xf32, #tpu.memory_space<vmem>>, vector<1x24xf32>
    %9 = vector.broadcast %8 : vector<1x24xf32> to vector<32x24xf32>
    %10 = arith.mulf %7, %9 : vector<32x24xf32>
    %c0_7 = arith.constant 0 : index
    %c0_8 = arith.constant 0 : index
    %11 = vector.load %arg4[%c0_7, %c0_8] : memref<1x24xf32, #tpu.memory_space<vmem>>, vector<1x24xf32>
    %12 = vector.broadcast %11 : vector<1x24xf32> to vector<32x24xf32>
    %13 = arith.addf %10, %12 : vector<32x24xf32>
    %c0_9 = arith.constant 0 : index
    %c0_10 = arith.constant 0 : index
    %14 = vector.load %arg5[%c0_9, %c0_10] : memref<32x24xf32, #tpu.memory_space<vmem>>, vector<32x24xf32>
    tpu.vector_store %arg5[%c0_9, %c0_10], %13 {strides = array<i32>} : memref<32x24xf32, #tpu.memory_space<vmem>>, vector<32x24xf32>,
    return
  }
  func.func @transform_0(%arg0: i32) -> (i32, i32) {
    %c0_i32 = arith.constant 0 : i32
    %c0_i32_0 = arith.constant 0 : i32
    return %arg0, %c0_i32 : i32, i32
  }
  func.func @transform_1(%arg0: i32) -> (i32, i32) {
    %c0_i32 = arith.constant 0 : i32
    %c0_i32_0 = arith.constant 0 : i32
    %c0_i32_1 = arith.constant 0 : i32
    return %c0_i32, %c0_i32_0 : i32, i32
  }
  func.func @transform_2(%arg0: i32) -> (i32, i32) {
    %c0_i32 = arith.constant 0 : i32
    %c0_i32_0 = arith.constant 0 : i32
    %c0_i32_1 = arith.constant 0 : i32
    return %c0_i32, %c0_i32_0 : i32, i32
  }
  func.func @transform_3(%arg0: i32) -> (i32, i32) {
    %c0_i32 = arith.constant 0 : i32
    %c0_i32_0 = arith.constant 0 : i32
    %c0_i32_1 = arith.constant 0 : i32
    return %c0_i32, %c0_i32_0 : i32, i32
  }
  func.func @transform_4(%arg0: i32) -> (i32, i32) {
    %c0_i32 = arith.constant 0 : i32
    %c0_i32_0 = arith.constant 0 : i32
    return %arg0, %c0_i32 : i32, i32
  }
}

</mosaic_0001>

<llo_original>
// kernel: tpu_custom_call.1
$region0: #{tpu_custom_call.1}
  #allocation0 [shape = 'u32[]', space=smem, size = 0x4, offset = 0x4, fixed_abs, tag = 'smem constant byte address 0x4 - core index']
  #allocation1 [shape = 'u32[144,128]{1,0:T(1,128)}', space=vmem, size = 0x12000, scoped, tag = 'internal scratch']
  %s0 = inlined_call_operand.vmem [shape: bf16[32,256], index: 0, kind: input, shape index: {}]
  %s1 = inlined_call_operand.vmem [shape: bf16[256,24], index: 1, kind: input, shape index: {}]
  %s2 = inlined_call_operand.vmem [shape: f32[1,24], index: 2, kind: input, shape index: {}]
  %s3 = inlined_call_operand.vmem [shape: f32[1,24], index: 3, kind: input, shape index: {}]
  %s4 = inlined_call_operand.vmem [shape: f32[32,24], index: 4, kind: output, shape index: {}]
  %s5 = sld [smem:[#allocation0]]
  $region26: #{tpu_custom_call.1} parent=0
    _
  %s7 = ssub.s32 1, %s5
  %s8 = scalar_select 0, %s7, %s5
  // Predicated region
  $region2: #{tpu_custom_call.1} parent=0 // pred_check
    _
  $region3: #{tpu_custom_call.1} parent=0 // pred_check_branch
    %10 = sbr.rel (0) target = $region5
  $region4: #{tpu_custom_call.1} parent=0 // pred_region
    _
  $region5: #{tpu_custom_call.1} parent=0 // pred_fallthru
    _
  // Predicated region
  $region6: #{tpu_custom_call.1} parent=0 // pred_check
    _
  $region7: #{tpu_custom_call.1} parent=0 // pred_check_branch
    %12 = sbr.rel (0) target = $region9
  $region8: #{tpu_custom_call.1} parent=0 // pred_region
    _
  $region9: #{tpu_custom_call.1} parent=0 // pred_fallthru
    _
  // Predicated region
  $region10: #{tpu_custom_call.1} parent=0 // pred_check
    _
  $region11: #{tpu_custom_call.1} parent=0 // pred_check_branch
    %14 = sbr.rel (0) target = $region13
  $region12: #{tpu_custom_call.1} parent=0 // pred_region
    _
  $region13: #{tpu_custom_call.1} parent=0 // pred_fallthru
    _
  // Predicated region
  $region14: #{tpu_custom_call.1} parent=0 // pred_check
    _
  $region15: #{tpu_custom_call.1} parent=0 // pred_check_branch
    %16 = sbr.rel (0) target = $region17
  $region16: #{tpu_custom_call.1} parent=0 // pred_region
    _
  $region17: #{tpu_custom_call.1} parent=0 // pred_fallthru
    _
  %v19 = vld [vmem:[%s0] sm:$0xff]
  %v20 = vld [vmem:[%s0 + $0x8] sm:$0xff]
  %v21 = vld [vmem:[%s0 + $0x10] sm:$0xff]
  %v22 = vld [vmem:[%s0 + $0x18] sm:$0xff]
  %vm23 = vcmp.gt.bf16.partialorder %v19, 0
  %vm24 = vcmp.gt.bf16.partialorder %v20, 0
  %vm25 = vcmp.gt.bf16.partialorder %v21, 0
  %vm26 = vcmp.gt.bf16.partialorder %v22, 0
  %v27 = vmul.bf16 %v19, 1045249613
  %v28 = vmul.bf16 %v20, 1045249613
  %v29 = vmul.bf16 %v21, 1045249613
  %v30 = vmul.bf16 %v22, 1045249613
  %v31 = vsel %vm23, %v19, %v27
  %v32 = vsel %vm24, %v20, %v28
  %v33 = vsel %vm25, %v21, %v29
  %v34 = vsel %vm26, %v22, %v30
  %v35 = vld [vmem:[%s1] sm:$0xf]
  %v36 = vld [vmem:[%s1 + $0x4] sm:$0xf]
  %v37 = vld [vmem:[%s1 + $0x8] sm:$0xf]
  %v38 = vld [vmem:[%s1 + $0xc] sm:$0xf]
  %v39 = vld [vmem:[%s1 + $0x10] sm:$0xf]
  %v40 = vld [vmem:[%s1 + $0x14] sm:$0xf]
  %v41 = vld [vmem:[%s1 + $0x18] sm:$0xf]
  %v42 = vld [vmem:[%s1 + $0x1c] sm:$0xf]
  %v43 = vld [vmem:[%s1 + $0x20] sm:$0xf]
  %v44 = vld [vmem:[%s1 + $0x24] sm:$0xf]
  %v45 = vld [vmem:[%s1 + $0x28] sm:$0xf]
  %v46 = vld [vmem:[%s1 + $0x2c] sm:$0xf]
  %v47 = vld [vmem:[%s1 + $0x30] sm:$0xf]
  %v48 = vld [vmem:[%s1 + $0x34] sm:$0xf]
  %v49 = vld [vmem:[%s1 + $0x38] sm:$0xf]
  %v50 = vld [vmem:[%s1 + $0x3c] sm:$0xf]
  %v51 = vld [vmem:[%s1 + $0x40] sm:$0xf]
  %v52 = vld [vmem:[%s1 + $0x44] sm:$0xf]
  %v53 = vld [vmem:[%s1 + $0x48] sm:$0xf]
  %v54 = vld [vmem:[%s1 + $0x4c] sm:$0xf]
  %v55 = vld [vmem:[%s1 + $0x50] sm:$0xf]
  %v56 = vld [vmem:[%s1 + $0x54] sm:$0xf]
  %v57 = vld [vmem:[%s1 + $0x58] sm:$0xf]
  %v58 = vld [vmem:[%s1 + $0x5c] sm:$0xf]
  %v59 = vld [vmem:[%s1 + $0x60] sm:$0xf]
  %v60 = vld [vmem:[%s1 + $0x64] sm:$0xf]
  %v61 = vld [vmem:[%s1 + $0x68] sm:$0xf]
  %v62 = vld [vmem:[%s1 + $0x6c] sm:$0xf]
  %v63 = vld [vmem:[%s1 + $0x70] sm:$0xf]
  %v64 = vld [vmem:[%s1 + $0x74] sm:$0xf]
  %v65 = vld [vmem:[%s1 + $0x78] sm:$0xf]
  %v66 = vld [vmem:[%s1 + $0x7c] sm:$0xf]
  %v71 = vunpack.c.l.b16 %v31
  %v72 = vunpack.c.h.b16 %v31
  %v73 = vunpack.c.l.b16 %v32
  %v74 = vunpack.c.h.b16 %v32
  %v75 = vunpack.c.l.b16 %v33
  %v76 = vunpack.c.h.b16 %v33
  %v77 = vunpack.c.l.b16 %v34
  %v78 = vunpack.c.h.b16 %v34
  %v79 = vpack.c.b16 %v73, %v71
  %v80 = vpack.c.b16 %v74, %v72
  %v81 = vpack.c.b16 %v77, %v75
  %v82 = vpack.c.b16 %v78, %v76
  %v119 = vunpack.c.l.b16 %v35
  %v120 = vunpack.c.l.b16 %v36
  %v121 = vunpack.c.l.b16 %v37
  %v122 = vunpack.c.l.b16 %v38
  %v123 = vunpack.c.l.b16 %v39
  %v124 = vunpack.c.l.b16 %v40
  %v125 = vunpack.c.l.b16 %v41
  %v126 = vunpack.c.l.b16 %v42
  %v127 = vunpack.c.l.b16 %v43
  %v128 = vunpack.c.l.b16 %v44
  %v129 = vunpack.c.l.b16 %v45
  %v130 = vunpack.c.l.b16 %v46
  %v131 = vunpack.c.l.b16 %v47
  %v132 = vunpack.c.l.b16 %v48
  %v133 = vunpack.c.l.b16 %v49
  %v134 = vunpack.c.l.b16 %v50
  %v135 = vunpack.c.l.b16 %v51
  %v136 = vunpack.c.l.b16 %v52
  %v137 = vunpack.c.l.b16 %v53
  %v138 = vunpack.c.l.b16 %v54
  %v139 = vunpack.c.l.b16 %v55
  %v140 = vunpack.c.l.b16 %v56
  %v141 = vunpack.c.l.b16 %v57
  %v142 = vunpack.c.l.b16 %v58
  %v143 = vunpack.c.l.b16 %v59
  %v144 = vunpack.c.l.b16 %v60
  %v145 = vunpack.c.l.b16 %v61
  %v146 = vunpack.c.l.b16 %v62
  %v147 = vunpack.c.l.b16 %v63
  %v148 = vunpack.c.l.b16 %v64
  %v149 = vunpack.c.l.b16 %v65
  %v150 = vunpack.c.l.b16 %v66
  %v151 = vpack.c.b16 %v120, %v119
  %v152 = vpack.c.b16 %v122, %v121
  %v153 = vpack.c.b16 %v124, %v123
  %v154 = vpack.c.b16 %v126, %v125
  %v155 = vpack.c.b16 %v128, %v127
  %v156 = vpack.c.b16 %v130, %v129
  %v157 = vpack.c.b16 %v132, %v131
  %v158 = vpack.c.b16 %v134, %v133
  %v159 = vpack.c.b16 %v136, %v135
  %v160 = vpack.c.b16 %v138, %v137
  %v161 = vpack.c.b16 %v140, %v139
  %v162 = vpack.c.b16 %v142, %v141
  %v163 = vpack.c.b16 %v144, %v143
  %v164 = vpack.c.b16 %v146, %v145
  %v165 = vpack.c.b16 %v148, %v147
  %v166 = vpack.c.b16 %v150, %v149
  %183 = vmatprep.subr.bf16.mxu0 0
  %184 = vmatpush1.bf16.msra.mxu0 %v151
  %185 = vmatprep.subr.bf16.mxu0 0
  %186 = vmatpush1.bf16.msra.mxu0 %v152
  %187 = vmatprep.subr.bf16.mxu0 0
  %188 = vmatpush1.bf16.msra.mxu0 %v153
  %189 = vmatprep.subr.bf16.mxu0 0
  %190 = vmatpush1.bf16.msra.mxu0 %v154
  %191 = vmatprep.subr.bf16.mxu0 0
  %192 = vmatpush1.bf16.msra.mxu0 %v155
  %193 = vmatprep.subr.bf16.mxu0 0
  %194 = vmatpush1.bf16.msra.mxu0 %v156
  %195 = vmatprep.subr.bf16.mxu0 0
  %196 = vmatpush1.bf16.msra.mxu0 %v157
  %197 = vmatprep.subr.bf16.mxu0 0
  %198 = vmatpush1.bf16.msra.mxu0 %v158
  %199 = vmatprep.subr.bf16.mxu0 0
  %200 = vmatpush1.bf16.msra.mxu0 %v159
  %201 = vmatprep.subr.bf16.mxu0 0
  %202 = vmatpush1.bf16.msra.mxu0 %v160
  %203 = vmatprep.subr.bf16.mxu0 0
  %204 = vmatpush1.bf16.msra.mxu0 %v161
  %205 = vmatprep.subr.bf16.mxu0 0
  %206 = vmatpush1.bf16.msra.mxu0 %v162
  %207 = vmatprep.subr.bf16.mxu0 0
  %208 = vmatpush1.bf16.msra.mxu0 %v163
  %209 = vmatprep.subr.bf16.mxu0 0
  %210 = vmatpush1.bf16.msra.mxu0 %v164
  %211 = vmatprep.subr.bf16.mxu0 0
  %212 = vmatpush1.bf16.msra.mxu0 %v165
  %213 = vmatprep.subr.bf16.mxu0 0
  %214 = vmatpush1.bf16.msra.mxu0 %v166
  %215 = vmatprep.mubr.bf16.mxu0 %v80
  %216 = vmatmul.mubr.bf16.gmra.mrb[0].mxu0 %v79
  %v217 = vpop.f32.mrb[0].mxu0
  %v218 = vadd.f32 0.0, %v217
  %v219 = vpop.f32.mrb[0].mxu0
  %v220 = vpop.f32.mrb[0].mxu0
  %v221 = vadd.f32 0.0, %v220
  %v222 = vpop.f32.mrb[0].mxu0
  %223 = vmatprep.mubr.bf16.mxu0 %v82
  %224 = vmatmul.mubr.bf16.gmra.mrb[0].mxu0 %v81
  %v225 = vpop.f32.mrb[0].mxu0
  %v226 = vadd.f32 0.0, %v225
  %v227 = vpop.f32.mrb[0].mxu0
  %v228 = vpop.f32.mrb[0].mxu0
  %v229 = vadd.f32 0.0, %v228
  %v230 = vpop.f32.mrb[0].mxu0
  %231 = vdwg.mxu0
  %v232 = vld [vmem:[%s2] sm:$0x1]
  %v234 = vlaneseq
  %v235 = vshrl.u32 %v234, 7
  %v236 = vsub.s32 0, %v235
  %v237 = vrot.slane %v232, %v236
  %v239 = vmul.f32 %v218, %v237
  %v240 = vmul.f32 %v221, %v237
  %v241 = vmul.f32 %v226, %v237
  %v242 = vmul.f32 %v229, %v237
  %v243 = vld [vmem:[%s3] sm:$0x1]
  %v245 = vlaneseq
  %v246 = vshrl.u32 %v245, 7
  %v247 = vsub.s32 0, %v246
  %v248 = vrot.slane %v243, %v247
  %v250 = vadd.f32 %v239, %v248
  %v251 = vadd.f32 %v240, %v248
  %v252 = vadd.f32 %v241, %v248
  %v253 = vadd.f32 %v242, %v248
  %vm254 = vcmask 195584
  %255 = vst.msk [vmem:[%s4] sm:$0xff] %vm254, %v250
  %256 = vst.msk [vmem:[%s4 + $0x8] sm:$0xff] %vm254, %v251
  %257 = vst.msk [vmem:[%s4 + $0x10] sm:$0xff] %vm254, %v252
  %258 = vst.msk [vmem:[%s4 + $0x18] sm:$0xff] %vm254, %v253
  // Predicated region
  $region18: #{tpu_custom_call.1} parent=0 // pred_check
    _
  $region19: #{tpu_custom_call.1} parent=0 // pred_check_branch
    %260 = sbr.rel (0) target = $region21
  $region20: #{tpu_custom_call.1} parent=0 // pred_region
    _
  $region21: #{tpu_custom_call.1} parent=0 // pred_fallthru
    _
  // Predicated region
  $region22: #{tpu_custom_call.1} parent=0 // pred_check
    _
  $region23: #{tpu_custom_call.1} parent=0 // pred_check_branch
    %262 = sbr.rel (0) target = $region25
  $region24: #{tpu_custom_call.1} parent=0 // pred_region
    _
  $region25: #{tpu_custom_call.1} parent=0 // pred_fallthru
    _

</llo_original>
